<compile_context>
chip_gen: v7x
topology: tpu7x:2x2x1
jax: 0.10.0
libtpu: 0.0.40
codegen_flags: <defaults>
</compile_context>

<pallas_src>
import functools

import jax
import jax.numpy as jnp
from jax.experimental import pallas as pl
from jax.experimental.pallas import tpu as pltpu

_LANE = 128
_TWO_PI = 6.283185307179586
_INV_2_24 = 1.0 / float(1 << 24)


def gaussian_noise_kernel(x_ref, bits_ref, o_ref, *, sigma):
    half = x_ref.shape[0] // 2

    def to_unit(bits_u32):
        # Top 24 bits -> uniform in [0, 1); pure shift/convert, no bitcast.
        return (bits_u32 >> 8).astype(jnp.int32).astype(jnp.float32) * _INV_2_24

    u1 = 1.0 - to_unit(bits_ref[:half, :])   # (0, 1] -> log is safe
    u2 = to_unit(bits_ref[half:, :])         # [0, 1)
    r = jnp.sqrt(-2.0 * jnp.log(u1))
    theta = _TWO_PI * u2
    sig = jnp.float32(sigma)

    # Both Box-Muller outputs fill the two sublane halves of the tile;
    # accumulate in f32 and cast once at the store.
    o_ref[:half, :] = (x_ref[:half, :].astype(jnp.float32)
                       + sig * (r * jnp.cos(theta))).astype(o_ref.dtype)
    o_ref[half:, :] = (x_ref[half:, :].astype(jnp.float32)
                       + sig * (r * jnp.sin(theta))).astype(o_ref.dtype)


def gaussian_noise(img, key, sigma=0.05, block_rows=2048):
    """Returns img + sigma * N(0, 1) noise (same shape/dtype as img)."""
    orig_shape = img.shape
    orig_dtype = img.dtype

    flat = img.reshape(-1)
    n = flat.shape[0]
    rows = pl.cdiv(n, _LANE)

    # Block rows: multiple of 16 sublanes (so each Box-Muller half is
    # 8-sublane aligned), capped at `block_rows`. With the 2048-row default,
    # per-step VMEM is ~3 MiB (x + bits + out), ~6 MiB double-buffered, well
    # under the 16 MiB v5e scoped default — no vmem_limit bump needed.
    br = min(block_rows, rows)
    br = max(16, ((br + 15) // 16) * 16)
    padded_rows = pl.cdiv(rows, br) * br
    padded_n = padded_rows * _LANE
    if padded_n != n:  # pad only when the flat size doesn't tile evenly
        flat = jnp.pad(flat, (0, padded_n - n))
    x2 = flat.reshape(padded_rows, _LANE)

    bits = jax.random.bits(key, (padded_rows, _LANE), dtype=jnp.uint32)

    out2 = pl.pallas_call(
        functools.partial(gaussian_noise_kernel, sigma=float(sigma)),
        out_shape=jax.ShapeDtypeStruct((padded_rows, _LANE), orig_dtype),
        grid=(padded_rows // br,),
        in_specs=[
            pl.BlockSpec((br, _LANE), lambda i: (i, 0)),
            pl.BlockSpec((br, _LANE), lambda i: (i, 0)),
        ],
        out_specs=pl.BlockSpec((br, _LANE), lambda i: (i, 0)),
        compiler_params=pltpu.CompilerParams(
            dimension_semantics=("parallel",)),
    )(x2, bits)

    out_flat = out2.reshape(-1)
    if padded_n != n:
        out_flat = out_flat[:n]
    return out_flat.reshape(orig_shape)


if __name__ == "__main__":
    sigma = 0.05
    root = jax.random.PRNGKey(0)
    k_img, k_noise = jax.random.split(root)
    img = jax.random.normal(k_img, (2, 4, 16, 16), dtype=jnp.float32)

    out = gaussian_noise(img, k_noise, sigma=sigma)
    out = jax.block_until_ready(out)

    # Sanity checks: shape/dtype preserved, added noise statistics ~ N(0, sigma^2).
    assert out.shape == img.shape and out.dtype == img.dtype
    noise = out - img
    mean = float(jnp.mean(noise))
    std = float(jnp.std(noise))
    assert abs(mean) < 0.02, f"noise mean off: {mean}"
    assert abs(std - sigma) < 0.02, f"noise std off: {std}"

    print("KERNEL_OK")
</pallas_src>

<mosaic_0001>
module attributes {stable_mosaic.version = 11 : i64} {
  func.func @gaussian_noise_kernel(%arg0: i32, %arg1: memref<16x128xf32, #tpu.memory_space<vmem>>, %arg2: memref<16x128xi32, #tpu.memory_space<vmem>>, %arg3: memref<16x128xf32, #tpu.memory_space<vmem>>) attributes {dimension_semantics = [#tpu.dimension_semantics<parallel>], iteration_bounds = array<i64: 1>, scalar_prefetch = 0 : i64, scratch_operands = 0 : i64, tpu.core_type = #tpu.core_type<tc>, window_params = [{transform_indices = @transform_0, window_bounds = array<i64: 16, 128>}, {transform_indices = @transform_1, window_bounds = array<i64: 16, 128>}, {transform_indices = @transform_2, window_bounds = array<i64: 16, 128>}]} {
    %c0 = arith.constant 0 : index
    %c0_0 = arith.constant 0 : index
    %0 = vector.load %arg2[%c0, %c0_0] : memref<16x128xi32, #tpu.memory_space<vmem>>, vector<8x128xi32>
    %c8_i32 = arith.constant 8 : i32
    %1 = vector.broadcast %c8_i32 : i32 to vector<8x128xi32>
    %2 = arith.shrui %0, %1 : vector<8x128xi32>
    %3 = arith.sitofp %2 : vector<8x128xi32> to vector<8x128xf32>
    %cst = arith.constant 5.96046448E-8 : f32
    %4 = vector.broadcast %cst : f32 to vector<8x128xf32>
    %5 = arith.mulf %3, %4 : vector<8x128xf32>
    %cst_1 = arith.constant 1.000000e+00 : f32
    %6 = vector.broadcast %cst_1 : f32 to vector<8x128xf32>
    %7 = arith.subf %6, %5 : vector<8x128xf32>
    %c8 = arith.constant 8 : index
    %c0_2 = arith.constant 0 : index
    %8 = vector.load %arg2[%c8, %c0_2] : memref<16x128xi32, #tpu.memory_space<vmem>>, vector<8x128xi32>
    %c8_i32_3 = arith.constant 8 : i32
    %9 = vector.broadcast %c8_i32_3 : i32 to vector<8x128xi32>
    %10 = arith.shrui %8, %9 : vector<8x128xi32>
    %11 = arith.sitofp %10 : vector<8x128xi32> to vector<8x128xf32>
    %cst_4 = arith.constant 5.96046448E-8 : f32
    %12 = vector.broadcast %cst_4 : f32 to vector<8x128xf32>
    %13 = arith.mulf %11, %12 : vector<8x128xf32>
    %14 = math.log %7 : vector<8x128xf32>
    %cst_5 = arith.constant -2.000000e+00 : f32
    %15 = vector.broadcast %cst_5 : f32 to vector<8x128xf32>
    %16 = arith.mulf %15, %14 : vector<8x128xf32>
    %17 = math.sqrt %16 : vector<8x128xf32>
    %cst_6 = arith.constant 6.28318548 : f32
    %18 = vector.broadcast %cst_6 : f32 to vector<8x128xf32>
    %19 = arith.mulf %18, %13 : vector<8x128xf32>
    %c0_7 = arith.constant 0 : index
    %c0_8 = arith.constant 0 : index
    %20 = vector.load %arg1[%c0_7, %c0_8] : memref<16x128xf32, #tpu.memory_space<vmem>>, vector<8x128xf32>
    %21 = math.cos %19 : vector<8x128xf32>
    %22 = arith.mulf %17, %21 : vector<8x128xf32>
    %cst_9 = arith.constant 5.000000e-02 : f32
    %23 = vector.broadcast %cst_9 : f32 to vector<8x128xf32>
    %24 = arith.mulf %23, %22 : vector<8x128xf32>
    %25 = arith.addf %20, %24 : vector<8x128xf32>
    %c0_10 = arith.constant 0 : index
    %c0_11 = arith.constant 0 : index
    %26 = vector.load %arg3[%c0_10, %c0_11] : memref<16x128xf32, #tpu.memory_space<vmem>>, vector<8x128xf32>
    tpu.vector_store %arg3[%c0_10, %c0_11], %25 {strides = array<i32>} : memref<16x128xf32, #tpu.memory_space<vmem>>, vector<8x128xf32>,
    %c8_12 = arith.constant 8 : index
    %c0_13 = arith.constant 0 : index
    %27 = vector.load %arg1[%c8_12, %c0_13] : memref<16x128xf32, #tpu.memory_space<vmem>>, vector<8x128xf32>
    %28 = math.sin %19 : vector<8x128xf32>
    %29 = arith.mulf %17, %28 : vector<8x128xf32>
    %cst_14 = arith.constant 5.000000e-02 : f32
    %30 = vector.broadcast %cst_14 : f32 to vector<8x128xf32>
    %31 = arith.mulf %30, %29 : vector<8x128xf32>
    %32 = arith.addf %27, %31 : vector<8x128xf32>
    %c8_15 = arith.constant 8 : index
    %c0_16 = arith.constant 0 : index
    %33 = vector.load %arg3[%c8_15, %c0_16] : memref<16x128xf32, #tpu.memory_space<vmem>>, vector<8x128xf32>
    tpu.vector_store %arg3[%c8_15, %c0_16], %32 {strides = array<i32>} : memref<16x128xf32, #tpu.memory_space<vmem>>, vector<8x128xf32>,
    return
  }
  func.func @transform_0(%arg0: i32) -> (i32, i32) {
    %c0_i32 = arith.constant 0 : i32
    %c0_i32_0 = arith.constant 0 : i32
    return %arg0, %c0_i32 : i32, i32
  }
  func.func @transform_1(%arg0: i32) -> (i32, i32) {
    %c0_i32 = arith.constant 0 : i32
    %c0_i32_0 = arith.constant 0 : i32
    return %arg0, %c0_i32 : i32, i32
  }
  func.func @transform_2(%arg0: i32) -> (i32, i32) {
    %c0_i32 = arith.constant 0 : i32
    %c0_i32_0 = arith.constant 0 : i32
    return %arg0, %c0_i32 : i32, i32
  }
}

</mosaic_0001>

<llo_original>
// kernel: tpu_custom_call.1
$region0: #{tpu_custom_call.1}
  #allocation0 [shape = 'u32[]', space=smem, size = 0x4, offset = 0x4, fixed_abs, tag = 'smem constant byte address 0x4 - core index']
  #allocation1 [shape = 'u32[144,128]{1,0:T(1,128)}', space=vmem, size = 0x12000, scoped, tag = 'internal scratch']
  %s0 = inlined_call_operand.hbm [shape: f32[16,128], index: 0, kind: input, shape index: {}]
  %s1 = inlined_call_operand.hbm [shape: u32[16,128], index: 1, kind: input, shape index: {}]
  %s2 = inlined_call_operand.hbm [shape: f32[16,128], index: 2, kind: output, shape index: {}]
  %s3 = sld [smem:[#allocation0]]
  $region26: #{tpu_custom_call.1} parent=0
    _
  %s5 = ssub.s32 1, %s3
  %s6 = scalar_select 0, %s5, %s3
  $region1: #{tpu_custom_call.1} parent=0
    #allocation2 [shape = 'u8[8192]{0}', space=vmem, size = 0x2000, scoped, tag = 'input window, operand 0, single buffered']
    #allocation3 [shape = 's32[1]{0}', space=sflag, size = 0x4, scoped, tag = 'scoped memory for tpu_custom_call.1']
    #allocation4 [shape = 's32[1]{0}', space=sflag, size = 0x4, scoped, tag = 'scoped memory for tpu_custom_call.1']
    #allocation5 [shape = 'u8[8192]{0}', space=vmem, size = 0x2000, scoped, tag = 'input window, operand 1, single buffered']
    #allocation6 [shape = 's32[1]{0}', space=sflag, size = 0x4, scoped, tag = 'scoped memory for tpu_custom_call.1']
    #allocation7 [shape = 'u8[8192]{0}', space=vmem, size = 0x2000, scoped, tag = 'output window, operand 0, single buffered']
    %7 = vsyncpa [#allocation3], 0
    %8 = vsyncpa [#allocation6], 0
    %9 = vsyncpa [#allocation4], 0
    // Predicated region
    $region2: #{tpu_custom_call.1} parent=1 // pred_check
      _
    $region3: #{tpu_custom_call.1} parent=1 // pred_check_branch
      %11 = sbr.rel (0) target = $region5
    $region4: #{tpu_custom_call.1} parent=1 // pred_region
      %s13 = ssub.s32 256, 256
      %14 = vsyncadd [#allocation3], %s13
      %s15 = sshll.u32 [#allocation2], 4
      %s16 = int_to_ptr.vmem [resolvable:$true] %s15
      %21 = dma.hbm_to_vmem [thread:$0]  %s0, 256, %s16, [#allocation3], 128, 128, 8
    $region5: #{tpu_custom_call.1} parent=1 // pred_fallthru
      _
    // Predicated region
    $region6: #{tpu_custom_call.1} parent=1 // pred_check
      _
    $region7: #{tpu_custom_call.1} parent=1 // pred_check_branch
      %23 = sbr.rel (0) target = $region9
    $region8: #{tpu_custom_call.1} parent=1 // pred_region
      %s25 = ssub.s32 256, 256
      %26 = vsyncadd [#allocation6], %s25
      %s27 = sshll.u32 [#allocation5], 4
      %s28 = int_to_ptr.vmem [resolvable:$true] %s27
      %33 = dma.hbm_to_vmem [thread:$0]  %s1, 256, %s28, [#allocation6], 128, 128, 8
    $region9: #{tpu_custom_call.1} parent=1 // pred_fallthru
      _
    // Predicated region
    $region10: #{tpu_custom_call.1} parent=1 // pred_check
      _
    $region11: #{tpu_custom_call.1} parent=1 // pred_check_branch
      %35 = sbr.rel (0) target = $region13
    $region12: #{tpu_custom_call.1} parent=1 // pred_region
      %36 = dma.done [#allocation3], 256
    $region13: #{tpu_custom_call.1} parent=1 // pred_fallthru
      _
    // Predicated region
    $region14: #{tpu_custom_call.1} parent=1 // pred_check
      _
    $region15: #{tpu_custom_call.1} parent=1 // pred_check_branch
      %38 = sbr.rel (0) target = $region17
    $region16: #{tpu_custom_call.1} parent=1 // pred_region
      %39 = dma.done [#allocation6], 256
    $region17: #{tpu_custom_call.1} parent=1 // pred_fallthru
      _
    %v40 = vld [vmem:[#allocation5] sm:$0xff]
    %v41 = vshrl.u32 %v40, 8
    %v42 = vcvt.s32.f32 %v41
    %v43 = vmul.f32 %v42, 5.9604645e-08
    %v44 = vsub.f32 1.0, %v43
    %v45 = vld [vmem:[#allocation5 + $0x8] sm:$0xff]
    %v46 = vshrl.u32 %v45, 8
    %v47 = vcvt.s32.f32 %v46
    %v48 = vmul.f32 %v47, 5.9604645e-08
    %v49 = vlog2.pop %v44
    %v50 = vmul.f32 %v49, 0.6931472
    %v51 = vmul.f32 %v50, -2.0
    %v52 = vrsqrt.pop %v51
    %v53 = vmul.f32 %v51, %v52
    %vm54 = vcmp.eq.f32.partialorder %v51, inf
    %v55 = vsel %vm54, %v51, %v53
    %vm56 = vcmp.eq.f32.partialorder %v51, 0.0
    %v57 = vand.u32 %v51, 2147483648
    %v58 = vsel %vm56, %v57, %v55
    %v59 = vmul.f32 %v48, 6.2831855
    %v60 = vld [vmem:[#allocation2] sm:$0xff]
    %v61 = vand.u32 2147483647, %v59
    %vm62 = vcmp.le.f32.partialorder %v61, 0.7853982
    %vm63 = vcmp.lt.s32.totalorder %v59, 0
    %v64 = vand.u32 %v59, 2139095040
    %v65 = vshrl.u32 %v64, 23
    %v66 = vsub.s32 %v65, 127
    %v67 = vand.u32 2147483647, %v59
    %v68 = vand.u32 %v67, 8388607
    %v69 = vor.u32 %v68, 8388608
    %v70 = vsub.s32 0, %v69
    %v71 = vadd.s32 %v66, 1
    %vm72 = vcmp.gt.s32.totalorder %v71, 0
    %v73 = vsel %vm72, %v71, 0
    %v74 = vshrl.u32 %v73, 5
    %v75 = vand.u32 %v73, 31
    %v76 = vsub.s32 32, %v75
    %v77 = vshrl.u32 683565275, %v76
    %v78 = vshll.u32 683565275, %v75
    %v79 = vshrl.u32 2475754826, %v76
    %v80 = vor.u32 %v78, %v79
    %v81 = vshll.u32 2475754826, %v75
    %v82 = vshrl.u32 2131351028, %v76
    %v83 = vor.u32 %v81, %v82
    %v84 = vshll.u32 2131351028, %v75
    %v85 = vshrl.u32 2102212464, %v76
    %v86 = vor.u32 %v84, %v85
    %v87 = vshll.u32 2102212464, %v75
    %v88 = vshrl.u32 920167782, %v76
    %v89 = vor.u32 %v87, %v88
    %v90 = vshll.u32 920167782, %v75
    %v91 = vshrl.u32 1326507024, %v76
    %v92 = vor.u32 %v90, %v91
    %vm93 = vcmp.lt.s32.totalorder %v74, 1
    %vm94 = vcmp.lt.s32.totalorder %v74, 2
    %vm95 = vcmp.lt.s32.totalorder %v74, 3
    %vm96 = vcmp.lt.s32.totalorder %v74, 4
    %v97 = vsel %vm93, %v77, %v80
    %v98 = vsel %vm96, %v86, 2102212464
    %v99 = vsel %vm95, %v83, %v98
    %v100 = vsel %vm94, %v97, %v99
    %v101 = vsel %vm93, %v80, %v83
    %v102 = vsel %vm96, %v89, 920167782
    %v103 = vsel %vm95, %v86, %v102
    %v104 = vsel %vm94, %v101, %v103
    %v105 = vsel %vm93, %v83, %v86
    %v106 = vsel %vm96, %v92, 1326507024
    %v107 = vsel %vm95, %v89, %v106
    %v108 = vsel %vm94, %v105, %v107
    %v109 = vshll.u32 %v69, 8
    %v110 = vmul.u32.u64.compose %v109, %v108
    %v111 = vextract.low.u32 %v110
    %v112 = vextract.high.u32 %v110
    %v113 = vmul.u32.u64.compose %v109, %v104
    %v114 = vextract.low.u32 %v113
    %v115 = vextract.high.u32 %v113
    %v116 = vmul.u32 %v109, %v100
    %v117 = vadd.s32 %v112, %v114
    %vm118 = vc.u32 %v112, %v114
    %v119 = vadd.s32 %v115, 1
    %v120 = vsel %vm118, %v119, %v115
    %v121 = vadd.s32 %v116, %v120
    %v122 = vadd.s32 %v121, 536870912
    %v123 = vshrl.u32 %v122, 30
    %v124 = vshll.u32 %v123, 30
    %v125 = vsub.s32 %v121, %v124
    %vm126 = vcmp.lt.s32.totalorder %v125, 0
    %v127 = vsub.s32 0, %v125
    %v128 = vsel %vm126, %v127, %v125
    %v129 = vclz %v128
    %v130 = vsub.s32 %v129, 2
    %vm131 = vcmp.gt.s32.totalorder 0, %v130
    %v132 = vsel %vm131, 0, %v130
    %v133 = vsub.s32 32, %v132
    %v134 = vshll.u32 %v125, %v132
    %v135 = vshrl.u32 %v117, %v133
    %v136 = vor.u32 %v134, %v135
    %v137 = vsub.s32 4294967266, %v132
    %v138 = vadd.s32 %v137, 127
    %v139 = vshll.u32 %v138, 23
    %v140 = vor.u32 4788187, %v139
    %v141 = vand.u32 2147483647, %v140
    %v143 = vcvt.s32.f32 %v136
    %v144 = vmul.f32 %v143, %v141
    %v145 = vxor.u32 %v144, 2147483648
    %v146 = vsel %vm63, %v145, %v144
    %v147 = vsub.s32 4, %v123
    %v148 = vsel %vm63, %v147, %v123
    %v149 = vsel %vm62, %v59, %v146
    %v150 = vsel %vm62, 0, %v148
    %v151 = vcosq.f32.pop %v149
    %v152 = vsinq.f32.pop %v149
    %vm153 = vweird.f32 %v59
    %v154 = vand.u32 %v150, 3
    %vm155 = vcmp.lt.s32.totalorder %v154, 2
    %vm156 = vcmp.eq.s32.totalorder %v154, 0
    %v157 = vxor.u32 %v152, 2147483648
    %v158 = vsel %vm156, %v151, %v157
    %vm159 = vcmp.eq.s32.totalorder %v154, 2
    %v160 = vxor.u32 %v151, 2147483648
    %v161 = vsel %vm159, %v160, %v152
    %v162 = vsel %vm155, %v158, %v161
    %v163 = vsel %vm153, nan, %v162
    %v164 = vmul.f32 %v58, %v163
    %v165 = vmul.f32 %v164, 0.05
    %v166 = vadd.f32 %v60, %v165
    %167 = vst [vmem:[#allocation7] sm:$0xff] %v166
    %v168 = vld [vmem:[#allocation2 + $0x8] sm:$0xff]
    %v169 = vand.u32 2147483647, %v59
    %vm170 = vcmp.le.f32.partialorder %v169, 0.7853982
    %vm171 = vcmp.lt.s32.totalorder %v59, 0
    %v172 = vand.u32 %v59, 2139095040
    %v173 = vshrl.u32 %v172, 23
    %v174 = vsub.s32 %v173, 127
    %v175 = vand.u32 2147483647, %v59
    %v176 = vand.u32 %v175, 8388607
    %v177 = vor.u32 %v176, 8388608
    %v178 = vsub.s32 0, %v177
    %v179 = vadd.s32 %v174, 1
    %vm180 = vcmp.gt.s32.totalorder %v179, 0
    %v181 = vsel %vm180, %v179, 0
    %v182 = vshrl.u32 %v181, 5
    %v183 = vand.u32 %v181, 31
    %v184 = vsub.s32 32, %v183
    %v185 = vshrl.u32 683565275, %v184
    %v186 = vshll.u32 683565275, %v183
    %v187 = vshrl.u32 2475754826, %v184
    %v188 = vor.u32 %v186, %v187
    %v189 = vshll.u32 2475754826, %v183
    %v190 = vshrl.u32 2131351028, %v184
    %v191 = vor.u32 %v189, %v190
    %v192 = vshll.u32 2131351028, %v183
    %v193 = vshrl.u32 2102212464, %v184
    %v194 = vor.u32 %v192, %v193
    %v195 = vshll.u32 2102212464, %v183
    %v196 = vshrl.u32 920167782, %v184
    %v197 = vor.u32 %v195, %v196
    %v198 = vshll.u32 920167782, %v183
    %v199 = vshrl.u32 1326507024, %v184
    %v200 = vor.u32 %v198, %v199
    %vm201 = vcmp.lt.s32.totalorder %v182, 1
    %vm202 = vcmp.lt.s32.totalorder %v182, 2
    %vm203 = vcmp.lt.s32.totalorder %v182, 3
    %vm204 = vcmp.lt.s32.totalorder %v182, 4
    %v205 = vsel %vm201, %v185, %v188
    %v206 = vsel %vm204, %v194, 2102212464
    %v207 = vsel %vm203, %v191, %v206
    %v208 = vsel %vm202, %v205, %v207
    %v209 = vsel %vm201, %v188, %v191
    %v210 = vsel %vm204, %v197, 920167782
    %v211 = vsel %vm203, %v194, %v210
    %v212 = vsel %vm202, %v209, %v211
    %v213 = vsel %vm201, %v191, %v194
    %v214 = vsel %vm204, %v200, 1326507024
    %v215 = vsel %vm203, %v197, %v214
    %v216 = vsel %vm202, %v213, %v215
    %v217 = vshll.u32 %v177, 8
    %v218 = vmul.u32.u64.compose %v217, %v216
    %v219 = vextract.low.u32 %v218
    %v220 = vextract.high.u32 %v218
    %v221 = vmul.u32.u64.compose %v217, %v212
    %v222 = vextract.low.u32 %v221
    %v223 = vextract.high.u32 %v221
    %v224 = vmul.u32 %v217, %v208
    %v225 = vadd.s32 %v220, %v222
    %vm226 = vc.u32 %v220, %v222
    %v227 = vadd.s32 %v223, 1
    %v228 = vsel %vm226, %v227, %v223
    %v229 = vadd.s32 %v224, %v228
    %v230 = vadd.s32 %v229, 536870912
    %v231 = vshrl.u32 %v230, 30
    %v232 = vshll.u32 %v231, 30
    %v233 = vsub.s32 %v229, %v232
    %vm234 = vcmp.lt.s32.totalorder %v233, 0
    %v235 = vsub.s32 0, %v233
    %v236 = vsel %vm234, %v235, %v233
    %v237 = vclz %v236
    %v238 = vsub.s32 %v237, 2
    %vm239 = vcmp.gt.s32.totalorder 0, %v238
    %v240 = vsel %vm239, 0, %v238
    %v241 = vsub.s32 32, %v240
    %v242 = vshll.u32 %v233, %v240
    %v243 = vshrl.u32 %v225, %v241
    %v244 = vor.u32 %v242, %v243
    %v245 = vsub.s32 4294967266, %v240
    %v246 = vadd.s32 %v245, 127
    %v247 = vshll.u32 %v246, 23
    %v248 = vor.u32 4788187, %v247
    %v249 = vand.u32 2147483647, %v248
    %v251 = vcvt.s32.f32 %v244
    %v252 = vmul.f32 %v251, %v249
    %v253 = vxor.u32 %v252, 2147483648
    %v254 = vsel %vm171, %v253, %v252
    %v255 = vsub.s32 4, %v231
    %v256 = vsel %vm171, %v255, %v231
    %v257 = vsel %vm170, %v59, %v254
    %v258 = vsel %vm170, 0, %v256
    %v259 = vcosq.f32.pop %v257
    %v260 = vsinq.f32.pop %v257
    %vm261 = vweird.f32 %v59
    %v262 = vadd.s32 %v258, 3
    %v263 = vand.u32 %v262, 3
    %vm264 = vcmp.lt.s32.totalorder %v263, 2
    %vm265 = vcmp.eq.s32.totalorder %v263, 0
    %v266 = vxor.u32 %v260, 2147483648
    %v267 = vsel %vm265, %v259, %v266
    %vm268 = vcmp.eq.s32.totalorder %v263, 2
    %v269 = vxor.u32 %v259, 2147483648
    %v270 = vsel %vm268, %v269, %v260
    %v271 = vsel %vm264, %v267, %v270
    %v272 = vsel %vm261, nan, %v271
    %v273 = vmul.f32 %v58, %v272
    %v274 = vmul.f32 %v273, 0.05
    %v275 = vadd.f32 %v168, %v274
    %276 = vst [vmem:[#allocation7 + $0x8] sm:$0xff] %v275
    // Predicated region
    $region18: #{tpu_custom_call.1} parent=1 // pred_check
      _
    $region19: #{tpu_custom_call.1} parent=1 // pred_check_branch
      %278 = sbr.rel (0) target = $region21
    $region20: #{tpu_custom_call.1} parent=1 // pred_region
      %s280 = ssub.s32 256, 256
      %281 = vsyncadd [#allocation4], %s280
      %s282 = sshll.u32 [#allocation7], 4
      %s283 = int_to_ptr.vmem [resolvable:$true] %s282
      %288 = dma.vmem_to_hbm [thread:$0]  %s283, 256, %s2, [#allocation4], 128, 128, 8
    $region21: #{tpu_custom_call.1} parent=1 // pred_fallthru
      _
    // Predicated region
    $region22: #{tpu_custom_call.1} parent=1 // pred_check
      _
    $region23: #{tpu_custom_call.1} parent=1 // pred_check_branch
      %290 = sbr.rel (0) target = $region25
    $region24: #{tpu_custom_call.1} parent=1 // pred_region
      %291 = dma.done [#allocation4], 256
    $region25: #{tpu_custom_call.1} parent=1 // pred_fallthru
      _
    %292 = vsyncpa [#allocation3], 1
    %293 = vsyncpa [#allocation6], 1
    %294 = vsyncpa [#allocation4], 1

</llo_original>
